<compile_context>
chip_gen: v6e
topology: v6e:2x2x1
jax: 0.10.0
libtpu: 0.0.40
codegen_flags: <defaults>
</compile_context>

<pallas_src>
import functools
import numpy as np
import jax
import jax.numpy as jnp
from jax.experimental import pallas as pl
from jax.experimental.pallas import tpu as pltpu

_NEG_FILL = float(np.finfo(np.float32).min)  # padding value for node confidences


def _round_up(x, m):
    return max(m, ((int(x) + m - 1) // m) * m)


def _plan(num_graphs, c_pad, n_pad, e_pad):
    """Pick graphs-per-block (G_BLK), padded graph count and index dtype."""
    # Bytes resident per graph in one block (inputs + outputs, int16 idx).
    per_graph = 4 * c_pad * n_pad + 4 * e_pad + 2 * n_pad + 4 * e_pad
    # ~2 MiB of block data per grid step amortizes per-step overhead and puts
    # this memory-bound kernel near the HBM roofline on all generations.
    g_blk = max(8, (2 << 20) // per_graph)
    # Bucket the batch size (pow2, >=32) -> stable compile cache across batches.
    g_bucket = max(32, int(pl.next_power_of_2(max(num_graphs, 1))))
    if g_blk >= g_bucket:
        # Whole bucketed batch fits one block: split in two so the parallel grid
        # axis can shard across v7x's two TensorCores (harmless on v5e/v6e).
        g_blk = g_bucket if g_bucket == 32 else g_bucket // 2
    if g_blk >= 32:
        g_blk = (g_blk // 32) * 32
        idx_dtype_name = "int16"   # graph axis 32-aligned -> (16,128) tiling OK
    else:
        g_blk = max(8, (g_blk // 8) * 8)
        idx_dtype_name = "int32"   # keep (8,128) f32-style tiling for safety
    # TODO(synk): pathologically large single graphs (per_graph >> 2 MiB) would
    # need tiling of the node/edge axes as well; not needed for this workload.
    g_pad = _round_up(g_bucket, g_blk)
    return g_blk, g_pad, idx_dtype_name


@functools.lru_cache(maxsize=None)
def _build_batched_call(g_pad, g_blk, c_pad, n_pad, e_pad, idx_dtype_name):
    """One fused kernel for a whole batch of graphs. Cached per shape bucket."""
    idx_dtype = {"int16": jnp.int16, "int32": jnp.int32}[idx_dtype_name]

    def kernel(node_conf_ref, edge_conf_ref, idx_ref, sig_ref):
        # node_conf_ref: [g_blk, c_pad, n_pad] (classes on sublanes, nodes on lanes)
        conf = node_conf_ref[...]
        maxv = jnp.max(conf, axis=1, keepdims=True)                  # [g_blk, 1, n_pad]
        cls = jax.lax.broadcasted_iota(jnp.int32, conf.shape, 1)     # class index
        # First index attaining the max (first-max tie-breaking, like torch CPU).
        # TODO(synk): an all-NaN row yields c_pad instead of propagating NaN like
        # torch.max; irrelevant for finite logits.
        idx = jnp.min(jnp.where(conf == maxv, cls, c_pad), axis=1)   # [g_blk, n_pad]
        idx_ref[...] = idx.astype(idx_ref.dtype)

        # Edge sigmoid (EUP op, free filler next to the XLU reductions).
        sig_ref[...] = jax.nn.sigmoid(edge_conf_ref[...])            # [g_blk, e_pad]

    call = pl.pallas_call(
        kernel,
        out_shape=(
            jax.ShapeDtypeStruct((g_pad, n_pad), idx_dtype),     # argmax indices
            jax.ShapeDtypeStruct((g_pad, e_pad), jnp.float32),   # sigmoid(edge conf)
        ),
        grid=(g_pad // g_blk,),
        in_specs=[
            pl.BlockSpec((g_blk, c_pad, n_pad), lambda g: (g, 0, 0)),
            pl.BlockSpec((g_blk, e_pad), lambda g: (g, 0)),
        ],
        out_specs=(
            pl.BlockSpec((g_blk, n_pad), lambda g: (g, 0)),
            pl.BlockSpec((g_blk, e_pad), lambda g: (g, 0)),
        ),
        compiler_params=pltpu.CompilerParams(
            # Graph-block axis is independent -> shards across v7x's 2 TCs.
            dimension_semantics=("parallel",),
            # Safe on every generation; raises v5e's 16 MiB default scoped VMEM.
            vmem_limit_bytes=32 * 1024 * 1024,
        ),
    )
    return jax.jit(call)


class RelPostProcessor:
    """JAX/Pallas port of geo_parse RelPostProcessor (test-time post-processing)."""

    def __init__(self, edge_thresh: float = 0.5):
        # cfg.MODEL.REL.EDGE_TH — deterministic, no learnable parameters.
        self.edge_thresh = float(edge_thresh)

    def forward(self, g_list, preds_det_lens):
        # TODO(synk): pred_rel.construct_text_label_pred / construct_edge_label_pred
        # and pred_det.extra_fields are host-side Python object mutations with no
        # tensor math; only their numerical inputs are produced here.
        num_graphs = len(g_list)
        if num_graphs == 0:
            return []

        node_confs = [np.asarray(g["node_confidence"], np.float32) for g in g_list]
        edge_confs = [np.asarray(g["edge_confidence"], np.float32).reshape(-1)
                      for g in g_list]
        n_sizes = [nc.shape[0] for nc in node_confs]
        c_sizes = [nc.shape[1] for nc in node_confs]
        e_sizes = [ec.shape[0] for ec in edge_confs]

        # Bucketed padded shapes (pow2 lanes, 8-aligned classes) -> fewer padded
        # bytes than "batch max each call" style recompiles, stable jit cache.
        c_pad = _round_up(max(c_sizes), 8)
        n_pad = max(128, int(pl.next_power_of_2(max(n_sizes))))
        e_pad = max(128, int(pl.next_power_of_2(max(e_sizes))))
        g_blk, g_pad, idx_dtype_name = _plan(num_graphs, c_pad, n_pad, e_pad)

        # Pack all graphs into lane-dense / sublane-dense batched buffers
        # (host-side layout glue only).
        node_batch = np.full((g_pad, c_pad, n_pad), _NEG_FILL, np.float32)
        edge_batch = np.zeros((g_pad, e_pad), np.float32)
        for gi in range(num_graphs):
            nc, ec = node_confs[gi], edge_confs[gi]
            node_batch[gi, :nc.shape[1], :nc.shape[0]] = nc.T            # -> [C, N]
            edge_batch[gi, :ec.shape[0]] = ec

        call = _build_batched_call(g_pad, g_blk, c_pad, n_pad, e_pad, idx_dtype_name)
        idx_dev, sig_dev = call(jnp.asarray(node_batch), jnp.asarray(edge_batch))
        jax.block_until_ready((idx_dev, sig_dev))     # single sync for the whole batch
        idx_np = np.asarray(idx_dev)                  # [g_pad, n_pad]
        sig_np = np.asarray(sig_dev)                  # [g_pad, e_pad]

        results = []
        for gi, (g, det_len) in enumerate(zip(g_list, preds_det_lens)):
            n, e = n_sizes[gi], e_sizes[gi]
            mask_np = np.asarray(g["node_mask"]).astype(bool).reshape(-1)

            # mask.sum() > 0 gate — host data, host scalar work (no device output).
            text_label_indices = None
            if mask_np.sum() > 0:
                # equivalent of torch.max(confidence[mask], dim=1).indices.cpu()
                text_label_indices = idx_np[gi, :n][mask_np]

            # NOTE: padded edge slots are sigmoid(0)=0.5 == default threshold;
            # they are sliced off here BEFORE thresholding, which keeps this safe.
            edge_sig = sig_np[gi, :e]                 # sigmoid().squeeze(-1)
            results.append({
                "text_label_indices": text_label_indices,           # per masked node
                "labels_text_truncated_len": int(det_len),          # labels_text[:len(pred_det)]
                "edge_conf_sigmoid": edge_sig,
                # conf > EDGE_TH — host-side, like construct_edge_label_pred
                "edge_labels": edge_sig > self.edge_thresh,
            })
        return results


if __name__ == "__main__":
    key = jax.random.PRNGKey(0)
    C = 8
    graph_sizes = [(16, 24), (10, 7)]     # (num_nodes, num_edges) per graph

    g_list, det_lens = [], []
    for gi, (n, e) in enumerate(graph_sizes):
        key, k1, k2, k3 = jax.random.split(key, 4)
        node_conf = jax.random.normal(k1, (n, C), dtype=jnp.float32)
        node_mask = (jax.random.uniform(k2, (n,)) > 0.5)
        if gi == 1:
            node_mask = jnp.zeros((n,), dtype=bool)   # exercise the mask.sum()==0 gate
        edge_conf = jax.random.normal(k3, (e, 1), dtype=jnp.float32)
        g_list.append({
            "node_confidence": node_conf,
            "node_mask": node_mask,
            "edge_confidence": edge_conf,
        })
        det_lens.append(n // 2)

    post = RelPostProcessor(edge_thresh=0.5)
    out = post.forward(g_list, det_lens)   # blocks internally (single sync)

    # sanity check against numpy / pure-JAX reference
    for g, r in zip(g_list, out):
        ref_sig = np.asarray(jax.nn.sigmoid(g["edge_confidence"]))[:, 0]
        assert np.allclose(r["edge_conf_sigmoid"], ref_sig, atol=1e-5)
        assert np.array_equal(r["edge_labels"], ref_sig > 0.5)
        mask_np = np.asarray(g["node_mask"]).astype(bool)
        if mask_np.sum() > 0:
            ref_idx = np.argmax(np.asarray(g["node_confidence"])[mask_np], axis=1)
            assert np.array_equal(np.asarray(r["text_label_indices"], np.int64), ref_idx)
        else:
            assert r["text_label_indices"] is None

    print("KERNEL_OK")
</pallas_src>

<mosaic_0001>
module attributes {stable_mosaic.version = 11 : i64} {
  func.func @kernel(%arg0: i32, %arg1: memref<32x8x128xf32, #tpu.memory_space<vmem>>, %arg2: memref<32x128xf32, #tpu.memory_space<vmem>>, %arg3: memref<32x128xi16, #tpu.memory_space<vmem>>, %arg4: memref<32x128xf32, #tpu.memory_space<vmem>>) attributes {dimension_semantics = [#tpu.dimension_semantics<parallel>], iteration_bounds = array<i64: 1>, scalar_prefetch = 0 : i64, scratch_operands = 0 : i64, tpu.core_type = #tpu.core_type<tc>, window_params = [{transform_indices = @transform_0, window_bounds = array<i64: 32, 8, 128>}, {transform_indices = @transform_1, window_bounds = array<i64: 32, 128>}, {transform_indices = @transform_2, window_bounds = array<i64: 32, 128>}, {transform_indices = @transform_3, window_bounds = array<i64: 32, 128>}]} {
    %c0 = arith.constant 0 : index
    %c0_0 = arith.constant 0 : index
    %c0_1 = arith.constant 0 : index
    %0 = vector.load %arg1[%c0, %c0_0, %c0_1] : memref<32x8x128xf32, #tpu.memory_space<vmem>>, vector<32x8x128xf32>
    %cst = arith.constant dense<0xFF800000> : vector<32x128xf32>
    %1 = vector.multi_reduction <maximumf>, %0, %cst [1] : vector<32x8x128xf32> to vector<32x128xf32>
    %2 = vector.shape_cast %1 : vector<32x128xf32> to vector<32x1x128xf32>
    %3 = tpu.iota {dimensions = array<i32: 1>} : vector<32x8x128xi32>
    %4 = vector.broadcast %2 : vector<32x1x128xf32> to vector<32x8x128xf32>
    %5 = arith.cmpf oeq, %0, %4 : vector<32x8x128xf32>
    %c8_i32 = arith.constant 8 : i32
    %6 = vector.broadcast %c8_i32 : i32 to vector<32x8x128xi32>
    %7 = arith.select %5, %3, %6 : vector<32x8x128xi1>, vector<32x8x128xi32>
    %cst_2 = arith.constant dense<2147483647> : vector<32x128xi32>
    %8 = vector.multi_reduction <minsi>, %7, %cst_2 [1] : vector<32x8x128xi32> to vector<32x128xi32>
    %9 = arith.trunci %8 : vector<32x128xi32> to vector<32x128xi16>
    %c0_3 = arith.constant 0 : index
    %c0_4 = arith.constant 0 : index
    %10 = vector.load %arg3[%c0_3, %c0_4] : memref<32x128xi16, #tpu.memory_space<vmem>>, vector<32x128xi16>
    tpu.vector_store %arg3[%c0_3, %c0_4], %9 {strides = array<i32>} : memref<32x128xi16, #tpu.memory_space<vmem>>, vector<32x128xi16>,
    %c0_5 = arith.constant 0 : index
    %c0_6 = arith.constant 0 : index
    %11 = vector.load %arg2[%c0_5, %c0_6] : memref<32x128xf32, #tpu.memory_space<vmem>>, vector<32x128xf32>
    %12 = arith.negf %11 : vector<32x128xf32>
    %13 = math.exp %12 : vector<32x128xf32>
    %cst_7 = arith.constant 1.000000e+00 : f32
    %14 = vector.broadcast %cst_7 : f32 to vector<32x128xf32>
    %15 = arith.addf %14, %13 : vector<32x128xf32>
    %16 = arith.divf %14, %15 : vector<32x128xf32>
    %c0_8 = arith.constant 0 : index
    %c0_9 = arith.constant 0 : index
    %17 = vector.load %arg4[%c0_8, %c0_9] : memref<32x128xf32, #tpu.memory_space<vmem>>, vector<32x128xf32>
    tpu.vector_store %arg4[%c0_8, %c0_9], %16 {strides = array<i32>} : memref<32x128xf32, #tpu.memory_space<vmem>>, vector<32x128xf32>,
    return
  }
  func.func @transform_0(%arg0: i32) -> (i32, i32, i32) {
    %c0_i32 = arith.constant 0 : i32
    %c0_i32_0 = arith.constant 0 : i32
    %c0_i32_1 = arith.constant 0 : i32
    return %arg0, %c0_i32, %c0_i32_0 : i32, i32, i32
  }
  func.func @transform_1(%arg0: i32) -> (i32, i32) {
    %c0_i32 = arith.constant 0 : i32
    %c0_i32_0 = arith.constant 0 : i32
    return %arg0, %c0_i32 : i32, i32
  }
  func.func @transform_2(%arg0: i32) -> (i32, i32) {
    %c0_i32 = arith.constant 0 : i32
    %c0_i32_0 = arith.constant 0 : i32
    return %arg0, %c0_i32 : i32, i32
  }
  func.func @transform_3(%arg0: i32) -> (i32, i32) {
    %c0_i32 = arith.constant 0 : i32
    %c0_i32_0 = arith.constant 0 : i32
    return %arg0, %c0_i32 : i32, i32
  }
}

</mosaic_0001>

<llo_original>
// kernel: tpu_custom_call.1
$region0: #{tpu_custom_call.1}
  #allocation0 [shape = 'u32[]', space=smem, size = 0x4, offset = 0x4, fixed_abs, tag = 'smem constant byte address 0x4 - core index']
  #allocation1 [shape = 'u32[144,128]{1,0:T(1,128)}', space=vmem, size = 0x12000, scoped, tag = 'internal scratch']
  %s0 = inlined_call_operand.hbm [shape: f32[32,8,128], index: 0, kind: input, shape index: {}]
  %s1 = inlined_call_operand.hbm [shape: f32[32,128], index: 1, kind: input, shape index: {}]
  %s2 = inlined_call_operand.hbm [shape: s16[32,128], index: 2, kind: output, shape index: {0}]
  %s3 = inlined_call_operand.hbm [shape: f32[32,128], index: 3, kind: output, shape index: {1}]
  %4 = xla_tuple %s2, %s3
  %s5 = sld [smem:[#allocation0]]
  $region34: #{tpu_custom_call.1} parent=0
    _
  %s7 = ssub.s32 1, %s5
  %s8 = scalar_select 0, %s7, %s5
  $region1: #{tpu_custom_call.1} parent=0
    #allocation2 [shape = 'u8[131072]{0}', space=vmem, size = 0x20000, scoped, tag = 'input window, operand 0, single buffered']
    #allocation3 [shape = 's32[1]{0}', space=sflag, size = 0x4, scoped, tag = 'scoped memory for tpu_custom_call.1']
    #allocation4 [shape = 's32[1]{0}', space=sflag, size = 0x4, scoped, tag = 'scoped memory for tpu_custom_call.1']
    #allocation5 [shape = 'u8[16384]{0}', space=vmem, size = 0x4000, scoped, tag = 'input window, operand 1, single buffered']
    #allocation6 [shape = 's32[1]{0}', space=sflag, size = 0x4, scoped, tag = 'scoped memory for tpu_custom_call.1']
    #allocation7 [shape = 'u8[8192]{0}', space=vmem, size = 0x2000, scoped, tag = 'output window, operand 0, single buffered']
    #allocation8 [shape = 'u8[16384]{0}', space=vmem, size = 0x4000, scoped, tag = 'output window, operand 1, single buffered']
    #allocation9 [shape = 's32[1]{0}', space=sflag, size = 0x4, scoped, tag = 'scoped memory for tpu_custom_call.1']
    %9 = vsyncpa [#allocation3], 0
    %10 = vsyncpa [#allocation6], 0
    %11 = vsyncpa [#allocation4], 0
    %12 = vsyncpa [#allocation9], 0
    // Predicated region
    $region2: #{tpu_custom_call.1} parent=1 // pred_check
      _
    $region3: #{tpu_custom_call.1} parent=1 // pred_check_branch
      %14 = sbr.rel (0) target = $region5
    $region4: #{tpu_custom_call.1} parent=1 // pred_region
      %s16 = ssub.s32 4096, 4096
      %17 = vsyncadd [#allocation3], %s16
      %s18 = sshll.u32 [#allocation2], 4
      %s19 = int_to_ptr.vmem [resolvable:$true] %s18
      %24 = dma.hbm_to_vmem [thread:$0]  %s0, 4096, %s19, [#allocation3], 128, 128, 8
    $region5: #{tpu_custom_call.1} parent=1 // pred_fallthru
      _
    // Predicated region
    $region6: #{tpu_custom_call.1} parent=1 // pred_check
      _
    $region7: #{tpu_custom_call.1} parent=1 // pred_check_branch
      %26 = sbr.rel (0) target = $region9
    $region8: #{tpu_custom_call.1} parent=1 // pred_region
      %s28 = ssub.s32 512, 512
      %29 = vsyncadd [#allocation6], %s28
      %s30 = sshll.u32 [#allocation5], 4
      %s31 = int_to_ptr.vmem [resolvable:$true] %s30
      %36 = dma.hbm_to_vmem [thread:$0]  %s1, 512, %s31, [#allocation6], 128, 128, 8
    $region9: #{tpu_custom_call.1} parent=1 // pred_fallthru
      _
    // Predicated region
    $region10: #{tpu_custom_call.1} parent=1 // pred_check
      _
    $region11: #{tpu_custom_call.1} parent=1 // pred_check_branch
      %38 = sbr.rel (0) target = $region13
    $region12: #{tpu_custom_call.1} parent=1 // pred_region
      %39 = dma.done [#allocation3], 4096
    $region13: #{tpu_custom_call.1} parent=1 // pred_fallthru
      _
    // Predicated region
    $region14: #{tpu_custom_call.1} parent=1 // pred_check
      _
    $region15: #{tpu_custom_call.1} parent=1 // pred_check_branch
      %41 = sbr.rel (0) target = $region17
    $region16: #{tpu_custom_call.1} parent=1 // pred_region
      %42 = dma.done [#allocation6], 512
    $region17: #{tpu_custom_call.1} parent=1 // pred_fallthru
      _
    %v43 = vld [vmem:[#allocation2] sm:$0xff]
    %v44 = vld [vmem:[#allocation2 + $0x8] sm:$0xff]
    %v45 = vld [vmem:[#allocation2 + $0x10] sm:$0xff]
    %v46 = vld [vmem:[#allocation2 + $0x18] sm:$0xff]
    %v47 = vld [vmem:[#allocation2 + $0x20] sm:$0xff]
    %v48 = vld [vmem:[#allocation2 + $0x28] sm:$0xff]
    %v49 = vld [vmem:[#allocation2 + $0x30] sm:$0xff]
    %v50 = vld [vmem:[#allocation2 + $0x38] sm:$0xff]
    %v51 = vld [vmem:[#allocation2 + $0x40] sm:$0xff]
    %v52 = vld [vmem:[#allocation2 + $0x48] sm:$0xff]
    %v53 = vld [vmem:[#allocation2 + $0x50] sm:$0xff]
    %v54 = vld [vmem:[#allocation2 + $0x58] sm:$0xff]
    %v55 = vld [vmem:[#allocation2 + $0x60] sm:$0xff]
    %v56 = vld [vmem:[#allocation2 + $0x68] sm:$0xff]
    %v57 = vld [vmem:[#allocation2 + $0x70] sm:$0xff]
    %v58 = vld [vmem:[#allocation2 + $0x78] sm:$0xff]
    %v59 = vld [vmem:[#allocation2 + $0x80] sm:$0xff]
    %v60 = vld [vmem:[#allocation2 + $0x88] sm:$0xff]
    %v61 = vld [vmem:[#allocation2 + $0x90] sm:$0xff]
    %v62 = vld [vmem:[#allocation2 + $0x98] sm:$0xff]
    %v63 = vld [vmem:[#allocation2 + $0xa0] sm:$0xff]
    %v64 = vld [vmem:[#allocation2 + $0xa8] sm:$0xff]
    %v65 = vld [vmem:[#allocation2 + $0xb0] sm:$0xff]
    %v66 = vld [vmem:[#allocation2 + $0xb8] sm:$0xff]
    %v67 = vld [vmem:[#allocation2 + $0xc0] sm:$0xff]
    %v68 = vld [vmem:[#allocation2 + $0xc8] sm:$0xff]
    %v69 = vld [vmem:[#allocation2 + $0xd0] sm:$0xff]
    %v70 = vld [vmem:[#allocation2 + $0xd8] sm:$0xff]
    %v71 = vld [vmem:[#allocation2 + $0xe0] sm:$0xff]
    %v72 = vld [vmem:[#allocation2 + $0xe8] sm:$0xff]
    %v73 = vld [vmem:[#allocation2 + $0xf0] sm:$0xff]
    %v74 = vld [vmem:[#allocation2 + $0xf8] sm:$0xff]
    %v75 = vrot.slane %v43, 4
    %v76 = vmax.f32 %v43, %v75
    %v77 = vrot.slane %v76, 2
    %v78 = vmax.f32 %v76, %v77
    %v79 = vrot.slane %v78, 1
    %v80 = vmax.f32 %v78, %v79
    %v81 = vrot.slane %v44, 4
    %v82 = vmax.f32 %v44, %v81
    %v83 = vrot.slane %v82, 2
    %v84 = vmax.f32 %v82, %v83
    %v85 = vrot.slane %v84, 1
    %v86 = vmax.f32 %v84, %v85
    %v87 = vrot.slane %v45, 4
    %v88 = vmax.f32 %v45, %v87
    %v89 = vrot.slane %v88, 2
    %v90 = vmax.f32 %v88, %v89
    %v91 = vrot.slane %v90, 1
    %v92 = vmax.f32 %v90, %v91
    %v93 = vrot.slane %v46, 4
    %v94 = vmax.f32 %v46, %v93
    %v95 = vrot.slane %v94, 2
    %v96 = vmax.f32 %v94, %v95
    %v97 = vrot.slane %v96, 1
    %v98 = vmax.f32 %v96, %v97
    %v99 = vrot.slane %v47, 4
    %v100 = vmax.f32 %v47, %v99
    %v101 = vrot.slane %v100, 2
    %v102 = vmax.f32 %v100, %v101
    %v103 = vrot.slane %v102, 1
    %v104 = vmax.f32 %v102, %v103
    %v105 = vrot.slane %v48, 4
    %v106 = vmax.f32 %v48, %v105
    %v107 = vrot.slane %v106, 2
    %v108 = vmax.f32 %v106, %v107
    %v109 = vrot.slane %v108, 1
    %v110 = vmax.f32 %v108, %v109
    %v111 = vrot.slane %v49, 4
    %v112 = vmax.f32 %v49, %v111
    %v113 = vrot.slane %v112, 2
    %v114 = vmax.f32 %v112, %v113
    %v115 = vrot.slane %v114, 1
    %v116 = vmax.f32 %v114, %v115
    %v117 = vrot.slane %v50, 4
    %v118 = vmax.f32 %v50, %v117
    %v119 = vrot.slane %v118, 2
    %v120 = vmax.f32 %v118, %v119
    %v121 = vrot.slane %v120, 1
    %v122 = vmax.f32 %v120, %v121
    %v123 = vrot.slane %v51, 4
    %v124 = vmax.f32 %v51, %v123
    %v125 = vrot.slane %v124, 2
    %v126 = vmax.f32 %v124, %v125
    %v127 = vrot.slane %v126, 1
    %v128 = vmax.f32 %v126, %v127
    %v129 = vrot.slane %v52, 4
    %v130 = vmax.f32 %v52, %v129
    %v131 = vrot.slane %v130, 2
    %v132 = vmax.f32 %v130, %v131
    %v133 = vrot.slane %v132, 1
    %v134 = vmax.f32 %v132, %v133
    %v135 = vrot.slane %v53, 4
    %v136 = vmax.f32 %v53, %v135
    %v137 = vrot.slane %v136, 2
    %v138 = vmax.f32 %v136, %v137
    %v139 = vrot.slane %v138, 1
    %v140 = vmax.f32 %v138, %v139
    %v141 = vrot.slane %v54, 4
    %v142 = vmax.f32 %v54, %v141
    %v143 = vrot.slane %v142, 2
    %v144 = vmax.f32 %v142, %v143
    %v145 = vrot.slane %v144, 1
    %v146 = vmax.f32 %v144, %v145
    %v147 = vrot.slane %v55, 4
    %v148 = vmax.f32 %v55, %v147
    %v149 = vrot.slane %v148, 2
    %v150 = vmax.f32 %v148, %v149
    %v151 = vrot.slane %v150, 1
    %v152 = vmax.f32 %v150, %v151
    %v153 = vrot.slane %v56, 4
    %v154 = vmax.f32 %v56, %v153
    %v155 = vrot.slane %v154, 2
    %v156 = vmax.f32 %v154, %v155
    %v157 = vrot.slane %v156, 1
    %v158 = vmax.f32 %v156, %v157
    %v159 = vrot.slane %v57, 4
    %v160 = vmax.f32 %v57, %v159
    %v161 = vrot.slane %v160, 2
    %v162 = vmax.f32 %v160, %v161
    %v163 = vrot.slane %v162, 1
    %v164 = vmax.f32 %v162, %v163
    %v165 = vrot.slane %v58, 4
    %v166 = vmax.f32 %v58, %v165
    %v167 = vrot.slane %v166, 2
    %v168 = vmax.f32 %v166, %v167
    %v169 = vrot.slane %v168, 1
    %v170 = vmax.f32 %v168, %v169
    %v171 = vrot.slane %v59, 4
    %v172 = vmax.f32 %v59, %v171
    %v173 = vrot.slane %v172, 2
    %v174 = vmax.f32 %v172, %v173
    %v175 = vrot.slane %v174, 1
    %v176 = vmax.f32 %v174, %v175
    %v177 = vrot.slane %v60, 4
    %v178 = vmax.f32 %v60, %v177
    %v179 = vrot.slane %v178, 2
    %v180 = vmax.f32 %v178, %v179
    %v181 = vrot.slane %v180, 1
    %v182 = vmax.f32 %v180, %v181
    %v183 = vrot.slane %v61, 4
    %v184 = vmax.f32 %v61, %v183
    %v185 = vrot.slane %v184, 2
    %v186 = vmax.f32 %v184, %v185
    %v187 = vrot.slane %v186, 1
    %v188 = vmax.f32 %v186, %v187
    %v189 = vrot.slane %v62, 4
    %v190 = vmax.f32 %v62, %v189
    %v191 = vrot.slane %v190, 2
    %v192 = vmax.f32 %v190, %v191
    %v193 = vrot.slane %v192, 1
    %v194 = vmax.f32 %v192, %v193
    %v195 = vrot.slane %v63, 4
    %v196 = vmax.f32 %v63, %v195
    %v197 = vrot.slane %v196, 2
    %v198 = vmax.f32 %v196, %v197
    %v199 = vrot.slane %v198, 1
    %v200 = vmax.f32 %v198, %v199
    %v201 = vrot.slane %v64, 4
    %v202 = vmax.f32 %v64, %v201
    %v203 = vrot.slane %v202, 2
    %v204 = vmax.f32 %v202, %v203
    %v205 = vrot.slane %v204, 1
    %v206 = vmax.f32 %v204, %v205
    %v207 = vrot.slane %v65, 4
    %v208 = vmax.f32 %v65, %v207
    %v209 = vrot.slane %v208, 2
    %v210 = vmax.f32 %v208, %v209
    %v211 = vrot.slane %v210, 1
    %v212 = vmax.f32 %v210, %v211
    %v213 = vrot.slane %v66, 4
    %v214 = vmax.f32 %v66, %v213
    %v215 = vrot.slane %v214, 2
    %v216 = vmax.f32 %v214, %v215
    %v217 = vrot.slane %v216, 1
    %v218 = vmax.f32 %v216, %v217
    %v219 = vrot.slane %v67, 4
    %v220 = vmax.f32 %v67, %v219
    %v221 = vrot.slane %v220, 2
    %v222 = vmax.f32 %v220, %v221
    %v223 = vrot.slane %v222, 1
    %v224 = vmax.f32 %v222, %v223
    %v225 = vrot.slane %v68, 4
    %v226 = vmax.f32 %v68, %v225
    %v227 = vrot.slane %v226, 2
    %v228 = vmax.f32 %v226, %v227
    %v229 = vrot.slane %v228, 1
    %v230 = vmax.f32 %v228, %v229
    %v231 = vrot.slane %v69, 4
    %v232 = vmax.f32 %v69, %v231
    %v233 = vrot.slane %v232, 2
    %v234 = vmax.f32 %v232, %v233
    %v235 = vrot.slane %v234, 1
    %v236 = vmax.f32 %v234, %v235
    %v237 = vrot.slane %v70, 4
    %v238 = vmax.f32 %v70, %v237
    %v239 = vrot.slane %v238, 2
    %v240 = vmax.f32 %v238, %v239
    %v241 = vrot.slane %v240, 1
    %v242 = vmax.f32 %v240, %v241
    %v243 = vrot.slane %v71, 4
    %v244 = vmax.f32 %v71, %v243
    %v245 = vrot.slane %v244, 2
    %v246 = vmax.f32 %v244, %v245
    %v247 = vrot.slane %v246, 1
    %v248 = vmax.f32 %v246, %v247
    %v249 = vrot.slane %v72, 4
    %v250 = vmax.f32 %v72, %v249
    %v251 = vrot.slane %v250, 2
    %v252 = vmax.f32 %v250, %v251
    %v253 = vrot.slane %v252, 1
    %v254 = vmax.f32 %v252, %v253
    %v255 = vrot.slane %v73, 4
    %v256 = vmax.f32 %v73, %v255
    %v257 = vrot.slane %v256, 2
    %v258 = vmax.f32 %v256, %v257
    %v259 = vrot.slane %v258, 1
    %v260 = vmax.f32 %v258, %v259
    %v261 = vrot.slane %v74, 4
    %v262 = vmax.f32 %v74, %v261
    %v263 = vrot.slane %v262, 2
    %v264 = vmax.f32 %v262, %v263
    %v265 = vrot.slane %v264, 1
    %v266 = vmax.f32 %v264, %v265
    %v267 = vlaneseq
    %v268 = vshrl.u32 %v267, 7
    %vm269 = vcmp.eq.f32.partialorder %v43, %v80
    %vm270 = vcmp.eq.f32.partialorder %v44, %v86
    %vm271 = vcmp.eq.f32.partialorder %v45, %v92
    %vm272 = vcmp.eq.f32.partialorder %v46, %v98
    %vm273 = vcmp.eq.f32.partialorder %v47, %v104
    %vm274 = vcmp.eq.f32.partialorder %v48, %v110
    %vm275 = vcmp.eq.f32.partialorder %v49, %v116
    %vm276 = vcmp.eq.f32.partialorder %v50, %v122
    %vm277 = vcmp.eq.f32.partialorder %v51, %v128
    %vm278 = vcmp.eq.f32.partialorder %v52, %v134
    %vm279 = vcmp.eq.f32.partialorder %v53, %v140
    %vm280 = vcmp.eq.f32.partialorder %v54, %v146
    %vm281 = vcmp.eq.f32.partialorder %v55, %v152
    %vm282 = vcmp.eq.f32.partialorder %v56, %v158
    %vm283 = vcmp.eq.f32.partialorder %v57, %v164
    %vm284 = vcmp.eq.f32.partialorder %v58, %v170
    %vm285 = vcmp.eq.f32.partialorder %v59, %v176
    %vm286 = vcmp.eq.f32.partialorder %v60, %v182
    %vm287 = vcmp.eq.f32.partialorder %v61, %v188
    %vm288 = vcmp.eq.f32.partialorder %v62, %v194
    %vm289 = vcmp.eq.f32.partialorder %v63, %v200
    %vm290 = vcmp.eq.f32.partialorder %v64, %v206
    %vm291 = vcmp.eq.f32.partialorder %v65, %v212
    %vm292 = vcmp.eq.f32.partialorder %v66, %v218
    %vm293 = vcmp.eq.f32.partialorder %v67, %v224
    %vm294 = vcmp.eq.f32.partialorder %v68, %v230
    %vm295 = vcmp.eq.f32.partialorder %v69, %v236
    %vm296 = vcmp.eq.f32.partialorder %v70, %v242
    %vm297 = vcmp.eq.f32.partialorder %v71, %v248
    %vm298 = vcmp.eq.f32.partialorder %v72, %v254
    %vm299 = vcmp.eq.f32.partialorder %v73, %v260
    %vm300 = vcmp.eq.f32.partialorder %v74, %v266
    %v301 = vsel %vm269, %v268, 8
    %v302 = vsel %vm270, %v268, 8
    %v303 = vsel %vm271, %v268, 8
    %v304 = vsel %vm272, %v268, 8
    %v305 = vsel %vm273, %v268, 8
    %v306 = vsel %vm274, %v268, 8
    %v307 = vsel %vm275, %v268, 8
    %v308 = vsel %vm276, %v268, 8
    %v309 = vsel %vm277, %v268, 8
    %v310 = vsel %vm278, %v268, 8
    %v311 = vsel %vm279, %v268, 8
    %v312 = vsel %vm280, %v268, 8
    %v313 = vsel %vm281, %v268, 8
    %v314 = vsel %vm282, %v268, 8
    %v315 = vsel %vm283, %v268, 8
    %v316 = vsel %vm284, %v268, 8
    %v317 = vsel %vm285, %v268, 8
    %v318 = vsel %vm286, %v268, 8
    %v319 = vsel %vm287, %v268, 8
    %v320 = vsel %vm288, %v268, 8
    %v321 = vsel %vm289, %v268, 8
    %v322 = vsel %vm290, %v268, 8
    %v323 = vsel %vm291, %v268, 8
    %v324 = vsel %vm292, %v268, 8
    %v325 = vsel %vm293, %v268, 8
    %v326 = vsel %vm294, %v268, 8
    %v327 = vsel %vm295, %v268, 8
    %v328 = vsel %vm296, %v268, 8
    %v329 = vsel %vm297, %v268, 8
    %v330 = vsel %vm298, %v268, 8
    %v331 = vsel %vm299, %v268, 8
    %v332 = vsel %vm300, %v268, 8
    %v333 = vrot.slane %v301, 4
    %vm334 = vcmp.lt.s32.totalorder %v301, %v333
    %v335 = vsel %vm334, %v301, %v333
    %v336 = vrot.slane %v335, 2
    %vm337 = vcmp.lt.s32.totalorder %v335, %v336
    %v338 = vsel %vm337, %v335, %v336
    %v339 = vrot.slane %v338, 1
    %vm340 = vcmp.lt.s32.totalorder %v338, %v339
    %v341 = vsel %vm340, %v338, %v339
    %v342 = vrot.slane %v302, 4
    %vm343 = vcmp.lt.s32.totalorder %v302, %v342
    %v344 = vsel %vm343, %v302, %v342
    %v345 = vrot.slane %v344, 2
    %vm346 = vcmp.lt.s32.totalorder %v344, %v345
    %v347 = vsel %vm346, %v344, %v345
    %v348 = vrot.slane %v347, 1
    %vm349 = vcmp.lt.s32.totalorder %v347, %v348
    %v350 = vsel %vm349, %v347, %v348
    %v351 = vrot.slane %v303, 4
    %vm352 = vcmp.lt.s32.totalorder %v303, %v351
    %v353 = vsel %vm352, %v303, %v351
    %v354 = vrot.slane %v353, 2
    %vm355 = vcmp.lt.s32.totalorder %v353, %v354
    %v356 = vsel %vm355, %v353, %v354
    %v357 = vrot.slane %v356, 1
    %vm358 = vcmp.lt.s32.totalorder %v356, %v357
    %v359 = vsel %vm358, %v356, %v357
    %v360 = vrot.slane %v304, 4
    %vm361 = vcmp.lt.s32.totalorder %v304, %v360
    %v362 = vsel %vm361, %v304, %v360
    %v363 = vrot.slane %v362, 2
    %vm364 = vcmp.lt.s32.totalorder %v362, %v363
    %v365 = vsel %vm364, %v362, %v363
    %v366 = vrot.slane %v365, 1
    %vm367 = vcmp.lt.s32.totalorder %v365, %v366
    %v368 = vsel %vm367, %v365, %v366
    %v369 = vrot.slane %v305, 4
    %vm370 = vcmp.lt.s32.totalorder %v305, %v369
    %v371 = vsel %vm370, %v305, %v369
    %v372 = vrot.slane %v371, 2
    %vm373 = vcmp.lt.s32.totalorder %v371, %v372
    %v374 = vsel %vm373, %v371, %v372
    %v375 = vrot.slane %v374, 1
    %vm376 = vcmp.lt.s32.totalorder %v374, %v375
    %v377 = vsel %vm376, %v374, %v375
    %v378 = vrot.slane %v306, 4
    %vm379 = vcmp.lt.s32.totalorder %v306, %v378
    %v380 = vsel %vm379, %v306, %v378
    %v381 = vrot.slane %v380, 2
    %vm382 = vcmp.lt.s32.totalorder %v380, %v381
    %v383 = vsel %vm382, %v380, %v381
    %v384 = vrot.slane %v383, 1
    %vm385 = vcmp.lt.s32.totalorder %v383, %v384
    %v386 = vsel %vm385, %v383, %v384
    %v387 = vrot.slane %v307, 4
    %vm388 = vcmp.lt.s32.totalorder %v307, %v387
    %v389 = vsel %vm388, %v307, %v387
    %v390 = vrot.slane %v389, 2
    %vm391 = vcmp.lt.s32.totalorder %v389, %v390
    %v392 = vsel %vm391, %v389, %v390
    %v393 = vrot.slane %v392, 1
    %vm394 = vcmp.lt.s32.totalorder %v392, %v393
    %v395 = vsel %vm394, %v392, %v393
    %v396 = vrot.slane %v308, 4
    %vm397 = vcmp.lt.s32.totalorder %v308, %v396
    %v398 = vsel %vm397, %v308, %v396
    %v399 = vrot.slane %v398, 2
    %vm400 = vcmp.lt.s32.totalorder %v398, %v399
    %v401 = vsel %vm400, %v398, %v399
    %v402 = vrot.slane %v401, 1
    %vm403 = vcmp.lt.s32.totalorder %v401, %v402
    %v404 = vsel %vm403, %v401, %v402
    %v405 = vrot.slane %v309, 4
    %vm406 = vcmp.lt.s32.totalorder %v309, %v405
    %v407 = vsel %vm406, %v309, %v405
    %v408 = vrot.slane %v407, 2
    %vm409 = vcmp.lt.s32.totalorder %v407, %v408
    %v410 = vsel %vm409, %v407, %v408
    %v411 = vrot.slane %v410, 1
    %vm412 = vcmp.lt.s32.totalorder %v410, %v411
    %v413 = vsel %vm412, %v410, %v411
    %v414 = vrot.slane %v310, 4
    %vm415 = vcmp.lt.s32.totalorder %v310, %v414
    %v416 = vsel %vm415, %v310, %v414
    %v417 = vrot.slane %v416, 2
    %vm418 = vcmp.lt.s32.totalorder %v416, %v417
    %v419 = vsel %vm418, %v416, %v417
    %v420 = vrot.slane %v419, 1
    %vm421 = vcmp.lt.s32.totalorder %v419, %v420
    %v422 = vsel %vm421, %v419, %v420
    %v423 = vrot.slane %v311, 4
    %vm424 = vcmp.lt.s32.totalorder %v311, %v423
    %v425 = vsel %vm424, %v311, %v423
    %v426 = vrot.slane %v425, 2
    %vm427 = vcmp.lt.s32.totalorder %v425, %v426
    %v428 = vsel %vm427, %v425, %v426
    %v429 = vrot.slane %v428, 1
    %vm430 = vcmp.lt.s32.totalorder %v428, %v429
    %v431 = vsel %vm430, %v428, %v429
    %v432 = vrot.slane %v312, 4
    %vm433 = vcmp.lt.s32.totalorder %v312, %v432
    %v434 = vsel %vm433, %v312, %v432
    %v435 = vrot.slane %v434, 2
    %vm436 = vcmp.lt.s32.totalorder %v434, %v435
    %v437 = vsel %vm436, %v434, %v435
    %v438 = vrot.slane %v437, 1
    %vm439 = vcmp.lt.s32.totalorder %v437, %v438
    %v440 = vsel %vm439, %v437, %v438
    %v441 = vrot.slane %v313, 4
    %vm442 = vcmp.lt.s32.totalorder %v313, %v441
    %v443 = vsel %vm442, %v313, %v441
    %v444 = vrot.slane %v443, 2
    %vm445 = vcmp.lt.s32.totalorder %v443, %v444
    %v446 = vsel %vm445, %v443, %v444
    %v447 = vrot.slane %v446, 1
    %vm448 = vcmp.lt.s32.totalorder %v446, %v447
    %v449 = vsel %vm448, %v446, %v447
    %v450 = vrot.slane %v314, 4
    %vm451 = vcmp.lt.s32.totalorder %v314, %v450
    %v452 = vsel %vm451, %v314, %v450
    %v453 = vrot.slane %v452, 2
    %vm454 = vcmp.lt.s32.totalorder %v452, %v453
    %v455 = vsel %vm454, %v452, %v453
    %v456 = vrot.slane %v455, 1
    %vm457 = vcmp.lt.s32.totalorder %v455, %v456
    %v458 = vsel %vm457, %v455, %v456
    %v459 = vrot.slane %v315, 4
    %vm460 = vcmp.lt.s32.totalorder %v315, %v459
    %v461 = vsel %vm460, %v315, %v459
    %v462 = vrot.slane %v461, 2
    %vm463 = vcmp.lt.s32.totalorder %v461, %v462
    %v464 = vsel %vm463, %v461, %v462
    %v465 = vrot.slane %v464, 1
    %vm466 = vcmp.lt.s32.totalorder %v464, %v465
    %v467 = vsel %vm466, %v464, %v465
    %v468 = vrot.slane %v316, 4
    %vm469 = vcmp.lt.s32.totalorder %v316, %v468
    %v470 = vsel %vm469, %v316, %v468
    %v471 = vrot.slane %v470, 2
    %vm472 = vcmp.lt.s32.totalorder %v470, %v471
    %v473 = vsel %vm472, %v470, %v471
    %v474 = vrot.slane %v473, 1
    %vm475 = vcmp.lt.s32.totalorder %v473, %v474
    %v476 = vsel %vm475, %v473, %v474
    %v477 = vrot.slane %v317, 4
    %vm478 = vcmp.lt.s32.totalorder %v317, %v477
    %v479 = vsel %vm478, %v317, %v477
    %v480 = vrot.slane %v479, 2
    %vm481 = vcmp.lt.s32.totalorder %v479, %v480
    %v482 = vsel %vm481, %v479, %v480
    %v483 = vrot.slane %v482, 1
    %vm484 = vcmp.lt.s32.totalorder %v482, %v483
    %v485 = vsel %vm484, %v482, %v483
    %v486 = vrot.slane %v318, 4
    %vm487 = vcmp.lt.s32.totalorder %v318, %v486
    %v488 = vsel %vm487, %v318, %v486
    %v489 = vrot.slane %v488, 2
    %vm490 = vcmp.lt.s32.totalorder %v488, %v489
    %v491 = vsel %vm490, %v488, %v489
    %v492 = vrot.slane %v491, 1
    %vm493 = vcmp.lt.s32.totalorder %v491, %v492
    %v494 = vsel %vm493, %v491, %v492
    %v495 = vrot.slane %v319, 4
    %vm496 = vcmp.lt.s32.totalorder %v319, %v495
    %v497 = vsel %vm496, %v319, %v495
    %v498 = vrot.slane %v497, 2
    %vm499 = vcmp.lt.s32.totalorder %v497, %v498
    %v500 = vsel %vm499, %v497, %v498
    %v501 = vrot.slane %v500, 1
    %vm502 = vcmp.lt.s32.totalorder %v500, %v501
    %v503 = vsel %vm502, %v500, %v501
    %v504 = vrot.slane %v320, 4
    %vm505 = vcmp.lt.s32.totalorder %v320, %v504
    %v506 = vsel %vm505, %v320, %v504
    %v507 = vrot.slane %v506, 2
    %vm508 = vcmp.lt.s32.totalorder %v506, %v507
    %v509 = vsel %vm508, %v506, %v507
    %v510 = vrot.slane %v509, 1
    %vm511 = vcmp.lt.s32.totalorder %v509, %v510
    %v512 = vsel %vm511, %v509, %v510
    %v513 = vrot.slane %v321, 4
    %vm514 = vcmp.lt.s32.totalorder %v321, %v513
    %v515 = vsel %vm514, %v321, %v513
    %v516 = vrot.slane %v515, 2
    %vm517 = vcmp.lt.s32.totalorder %v515, %v516
    %v518 = vsel %vm517, %v515, %v516
    %v519 = vrot.slane %v518, 1
    %vm520 = vcmp.lt.s32.totalorder %v518, %v519
    %v521 = vsel %vm520, %v518, %v519
    %v522 = vrot.slane %v322, 4
    %vm523 = vcmp.lt.s32.totalorder %v322, %v522
    %v524 = vsel %vm523, %v322, %v522
    %v525 = vrot.slane %v524, 2
    %vm526 = vcmp.lt.s32.totalorder %v524, %v525
    %v527 = vsel %vm526, %v524, %v525
    %v528 = vrot.slane %v527, 1
    %vm529 = vcmp.lt.s32.totalorder %v527, %v528
    %v530 = vsel %vm529, %v527, %v528
    %v531 = vrot.slane %v323, 4
    %vm532 = vcmp.lt.s32.totalorder %v323, %v531
    %v533 = vsel %vm532, %v323, %v531
    %v534 = vrot.slane %v533, 2
    %vm535 = vcmp.lt.s32.totalorder %v533, %v534
    %v536 = vsel %vm535, %v533, %v534
    %v537 = vrot.slane %v536, 1
    %vm538 = vcmp.lt.s32.totalorder %v536, %v537
    %v539 = vsel %vm538, %v536, %v537
    %v540 = vrot.slane %v324, 4
    %vm541 = vcmp.lt.s32.totalorder %v324, %v540
    %v542 = vsel %vm541, %v324, %v540
    %v543 = vrot.slane %v542, 2
    %vm544 = vcmp.lt.s32.totalorder %v542, %v543
    %v545 = vsel %vm544, %v542, %v543
    %v546 = vrot.slane %v545, 1
    %vm547 = vcmp.lt.s32.totalorder %v545, %v546
    %v548 = vsel %vm547, %v545, %v546
    %v549 = vrot.slane %v325, 4
    %vm550 = vcmp.lt.s32.totalorder %v325, %v549
    %v551 = vsel %vm550, %v325, %v549
    %v552 = vrot.slane %v551, 2
    %vm553 = vcmp.lt.s32.totalorder %v551, %v552
    %v554 = vsel %vm553, %v551, %v552
    %v555 = vrot.slane %v554, 1
    %vm556 = vcmp.lt.s32.totalorder %v554, %v555
    %v557 = vsel %vm556, %v554, %v555
    %v558 = vrot.slane %v326, 4
    %vm559 = vcmp.lt.s32.totalorder %v326, %v558
    %v560 = vsel %vm559, %v326, %v558
    %v561 = vrot.slane %v560, 2
    %vm562 = vcmp.lt.s32.totalorder %v560, %v561
    %v563 = vsel %vm562, %v560, %v561
    %v564 = vrot.slane %v563, 1
    %vm565 = vcmp.lt.s32.totalorder %v563, %v564
    %v566 = vsel %vm565, %v563, %v564
    %v567 = vrot.slane %v327, 4
    %vm568 = vcmp.lt.s32.totalorder %v327, %v567
    %v569 = vsel %vm568, %v327, %v567
    %v570 = vrot.slane %v569, 2
    %vm571 = vcmp.lt.s32.totalorder %v569, %v570
    %v572 = vsel %vm571, %v569, %v570
    %v573 = vrot.slane %v572, 1
    %vm574 = vcmp.lt.s32.totalorder %v572, %v573
    %v575 = vsel %vm574, %v572, %v573
    %v576 = vrot.slane %v328, 4
    %vm577 = vcmp.lt.s32.totalorder %v328, %v576
    %v578 = vsel %vm577, %v328, %v576
    %v579 = vrot.slane %v578, 2
    %vm580 = vcmp.lt.s32.totalorder %v578, %v579
    %v581 = vsel %vm580, %v578, %v579
    %v582 = vrot.slane %v581, 1
    %vm583 = vcmp.lt.s32.totalorder %v581, %v582
    %v584 = vsel %vm583, %v581, %v582
    %v585 = vrot.slane %v329, 4
    %vm586 = vcmp.lt.s32.totalorder %v329, %v585
    %v587 = vsel %vm586, %v329, %v585
    %v588 = vrot.slane %v587, 2
    %vm589 = vcmp.lt.s32.totalorder %v587, %v588
    %v590 = vsel %vm589, %v587, %v588
    %v591 = vrot.slane %v590, 1
    %vm592 = vcmp.lt.s32.totalorder %v590, %v591
    %v593 = vsel %vm592, %v590, %v591
    %v594 = vrot.slane %v330, 4
    %vm595 = vcmp.lt.s32.totalorder %v330, %v594
    %v596 = vsel %vm595, %v330, %v594
    %v597 = vrot.slane %v596, 2
    %vm598 = vcmp.lt.s32.totalorder %v596, %v597
    %v599 = vsel %vm598, %v596, %v597
    %v600 = vrot.slane %v599, 1
    %vm601 = vcmp.lt.s32.totalorder %v599, %v600
    %v602 = vsel %vm601, %v599, %v600
    %v603 = vrot.slane %v331, 4
    %vm604 = vcmp.lt.s32.totalorder %v331, %v603
    %v605 = vsel %vm604, %v331, %v603
    %v606 = vrot.slane %v605, 2
    %vm607 = vcmp.lt.s32.totalorder %v605, %v606
    %v608 = vsel %vm607, %v605, %v606
    %v609 = vrot.slane %v608, 1
    %vm610 = vcmp.lt.s32.totalorder %v608, %v609
    %v611 = vsel %vm610, %v608, %v609
    %v612 = vrot.slane %v332, 4
    %vm613 = vcmp.lt.s32.totalorder %v332, %v612
    %v614 = vsel %vm613, %v332, %v612
    %v615 = vrot.slane %v614, 2
    %vm616 = vcmp.lt.s32.totalorder %v614, %v615
    %v617 = vsel %vm616, %v614, %v615
    %v618 = vrot.slane %v617, 1
    %vm619 = vcmp.lt.s32.totalorder %v617, %v618
    %v620 = vsel %vm619, %v617, %v618
    %v621 = vpack.c.b16 %v341, %v341
    %v622 = vpack.c.b16 %v350, %v350
    %v623 = vpack.c.b16 %v359, %v359
    %v624 = vpack.c.b16 %v368, %v368
    %v625 = vpack.c.b16 %v377, %v377
    %v626 = vpack.c.b16 %v386, %v386
    %v627 = vpack.c.b16 %v395, %v395
    %v628 = vpack.c.b16 %v404, %v404
    %v629 = vpack.c.b16 %v413, %v413
    %v630 = vpack.c.b16 %v422, %v422
    %v631 = vpack.c.b16 %v431, %v431
    %v632 = vpack.c.b16 %v440, %v440
    %v633 = vpack.c.b16 %v449, %v449
    %v634 = vpack.c.b16 %v458, %v458
    %v635 = vpack.c.b16 %v467, %v467
    %v636 = vpack.c.b16 %v476, %v476
    %v637 = vpack.c.b16 %v485, %v485
    %v638 = vpack.c.b16 %v494, %v494
    %v639 = vpack.c.b16 %v503, %v503
    %v640 = vpack.c.b16 %v512, %v512
    %v641 = vpack.c.b16 %v521, %v521
    %v642 = vpack.c.b16 %v530, %v530
    %v643 = vpack.c.b16 %v539, %v539
    %v644 = vpack.c.b16 %v548, %v548
    %v645 = vpack.c.b16 %v557, %v557
    %v646 = vpack.c.b16 %v566, %v566
    %v647 = vpack.c.b16 %v575, %v575
    %v648 = vpack.c.b16 %v584, %v584
    %v649 = vpack.c.b16 %v593, %v593
    %v650 = vpack.c.b16 %v602, %v602
    %v651 = vpack.c.b16 %v611, %v611
    %v652 = vpack.c.b16 %v620, %v620
    %v653 = vunpack.c.l.b16 %v621
    %v654 = vunpack.c.l.b16 %v622
    %v655 = vunpack.c.l.b16 %v623
    %v656 = vunpack.c.l.b16 %v624
    %v657 = vunpack.c.l.b16 %v625
    %v658 = vunpack.c.l.b16 %v626
    %v659 = vunpack.c.l.b16 %v627
    %v660 = vunpack.c.l.b16 %v628
    %v661 = vunpack.c.l.b16 %v629
    %v662 = vunpack.c.l.b16 %v630
    %v663 = vunpack.c.l.b16 %v631
    %v664 = vunpack.c.l.b16 %v632
    %v665 = vunpack.c.l.b16 %v633
    %v666 = vunpack.c.l.b16 %v634
    %v667 = vunpack.c.l.b16 %v635
    %v668 = vunpack.c.l.b16 %v636
    %v669 = vunpack.c.l.b16 %v637
    %v670 = vunpack.c.l.b16 %v638
    %v671 = vunpack.c.l.b16 %v639
    %v672 = vunpack.c.l.b16 %v640
    %v673 = vunpack.c.l.b16 %v641
    %v674 = vunpack.c.l.b16 %v642
    %v675 = vunpack.c.l.b16 %v643
    %v676 = vunpack.c.l.b16 %v644
    %v677 = vunpack.c.l.b16 %v645
    %v678 = vunpack.c.l.b16 %v646
    %v679 = vunpack.c.l.b16 %v647
    %v680 = vunpack.c.l.b16 %v648
    %v681 = vunpack.c.l.b16 %v649
    %v682 = vunpack.c.l.b16 %v650
    %v683 = vunpack.c.l.b16 %v651
    %v684 = vunpack.c.l.b16 %v652
    %vm685 = vcmask 1041409
    %v686 = vsel %vm685, %v654, %v653
    %vm687 = vcmask 1042434
    %v688 = vsel %vm687, %v655, %v686
    %vm689 = vcmask 1043459
    %v690 = vsel %vm689, %v656, %v688
    %vm691 = vcmask 1044484
    %v692 = vsel %vm691, %v657, %v690
    %vm693 = vcmask 1045509
    %v694 = vsel %vm693, %v658, %v692
    %vm695 = vcmask 1046534
    %v696 = vsel %vm695, %v659, %v694
    %vm697 = vcmask 1047559
    %v698 = vsel %vm697, %v660, %v696
    %v699 = vsel %vm685, %v662, %v661
    %v700 = vsel %vm687, %v663, %v699
    %v701 = vsel %vm689, %v664, %v700
    %v702 = vsel %vm691, %v665, %v701
    %v703 = vsel %vm693, %v666, %v702
    %v704 = vsel %vm695, %v667, %v703
    %v705 = vsel %vm697, %v668, %v704
    %v706 = vsel %vm685, %v670, %v669
    %v707 = vsel %vm687, %v671, %v706
    %v708 = vsel %vm689, %v672, %v707
    %v709 = vsel %vm691, %v673, %v708
    %v710 = vsel %vm693, %v674, %v709
    %v711 = vsel %vm695, %v675, %v710
    %v712 = vsel %vm697, %v676, %v711
    %v713 = vsel %vm685, %v678, %v677
    %v714 = vsel %vm687, %v679, %v713
    %v715 = vsel %vm689, %v680, %v714
    %v716 = vsel %vm691, %v681, %v715
    %v717 = vsel %vm693, %v682, %v716
    %v718 = vsel %vm695, %v683, %v717
    %v719 = vsel %vm697, %v684, %v718
    %v720 = vpack.c.b16 %v698, %v698
    %v721 = vpack.c.b16 %v705, %v705
    %v722 = vpack.c.b16 %v712, %v712
    %v723 = vpack.c.b16 %v719, %v719
    %724 = vst [vmem:[#allocation7] sm:$0xf] %v720
    %725 = vst [vmem:[#allocation7 + $0x4] sm:$0xf] %v721
    %726 = vst [vmem:[#allocation7 + $0x8] sm:$0xf] %v722
    %727 = vst [vmem:[#allocation7 + $0xc] sm:$0xf] %v723
    %v728 = vld [vmem:[#allocation5] sm:$0xff]
    %v729 = vld [vmem:[#allocation5 + $0x8] sm:$0xff]
    %v730 = vld [vmem:[#allocation5 + $0x10] sm:$0xff]
    %v731 = vld [vmem:[#allocation5 + $0x18] sm:$0xff]
    %v732 = vxor.u32 %v728, 2147483648
    %v733 = vxor.u32 %v729, 2147483648
    %v734 = vxor.u32 %v730, 2147483648
    %v735 = vxor.u32 %v731, 2147483648
    %v736 = vmul.f32 %v732, 1.442695
    %v737 = vpow.pop %v736
    %v738 = vmul.f32 %v733, 1.442695
    %v739 = vpow.pop %v738
    %v740 = vmul.f32 %v734, 1.442695
    %v741 = vpow.pop %v740
    %v742 = vmul.f32 %v735, 1.442695
    %v743 = vpow.pop %v742
    %v744 = vadd.f32 %v737, 1.0
    %v745 = vadd.f32 %v739, 1.0
    %v746 = vadd.f32 %v741, 1.0
    %v747 = vadd.f32 %v743, 1.0
    %v748 = vrcp.pop %v744
    %v749 = vmul.f32 1.0, %v748
    %v750 = vrcp.pop %v745
    %v751 = vmul.f32 1.0, %v750
    %v752 = vrcp.pop %v746
    %v753 = vmul.f32 1.0, %v752
    %v754 = vrcp.pop %v747
    %v755 = vmul.f32 1.0, %v754
    %756 = vst [vmem:[#allocation8] sm:$0xff] %v749
    %757 = vst [vmem:[#allocation8 + $0x8] sm:$0xff] %v751
    %758 = vst [vmem:[#allocation8 + $0x10] sm:$0xff] %v753
    %759 = vst [vmem:[#allocation8 + $0x18] sm:$0xff] %v755
    // Predicated region
    $region18: #{tpu_custom_call.1} parent=1 // pred_check
      _
    $region19: #{tpu_custom_call.1} parent=1 // pred_check_branch
      %761 = sbr.rel (0) target = $region21
    $region20: #{tpu_custom_call.1} parent=1 // pred_region
      %s763 = ssub.s32 256, 256
      %764 = vsyncadd [#allocation4], %s763
      %s765 = sshll.u32 [#allocation7], 4
      %s766 = int_to_ptr.vmem [resolvable:$true] %s765
      %771 = dma.vmem_to_hbm [thread:$0]  %s766, 256, %s2, [#allocation4], 64, 64, 4
    $region21: #{tpu_custom_call.1} parent=1 // pred_fallthru
      _
    // Predicated region
    $region22: #{tpu_custom_call.1} parent=1 // pred_check
      _
    $region23: #{tpu_custom_call.1} parent=1 // pred_check_branch
      %773 = sbr.rel (0) target = $region25
    $region24: #{tpu_custom_call.1} parent=1 // pred_region
      %s775 = ssub.s32 512, 512
      %776 = vsyncadd [#allocation9], %s775
      %s777 = sshll.u32 [#allocation8], 4
      %s778 = int_to_ptr.vmem [resolvable:$true] %s777
      %783 = dma.vmem_to_hbm [thread:$0]  %s778, 512, %s3, [#allocation9], 128, 128, 8
    $region25: #{tpu_custom_call.1} parent=1 // pred_fallthru
      _
    // Predicated region
    $region26: #{tpu_custom_call.1} parent=1 // pred_check
      _
    $region27: #{tpu_custom_call.1} parent=1 // pred_check_branch
      %785 = sbr.rel (0) target = $region29
    $region28: #{tpu_custom_call.1} parent=1 // pred_region
      %786 = dma.done [#allocation4], 256
    $region29: #{tpu_custom_call.1} parent=1 // pred_fallthru
      _
    // Predicated region
    $region30: #{tpu_custom_call.1} parent=1 // pred_check
      _
    $region31: #{tpu_custom_call.1} parent=1 // pred_check_branch
      %788 = sbr.rel (0) target = $region33
    $region32: #{tpu_custom_call.1} parent=1 // pred_region
      %789 = dma.done [#allocation9], 512
    $region33: #{tpu_custom_call.1} parent=1 // pred_fallthru
      _
    %790 = vsyncpa [#allocation3], 1
    %791 = vsyncpa [#allocation6], 1
    %792 = vsyncpa [#allocation4], 1
    %793 = vsyncpa [#allocation9], 1

</llo_original>
